<compile_context>
chip_gen: v7x
topology: tpu7x:2x2x1
jax: 0.10.0
libtpu: 0.0.40
codegen_flags: <defaults>
</compile_context>

<pallas_src>
import functools

import jax
import jax.numpy as jnp
from jax.experimental import pallas as pl
from jax.experimental.pallas import tpu as pltpu

_MIB = 1024 * 1024
_MAX_IMAGES_PER_BLOCK = 16  # cap on statically-unrolled per-image matmuls


def _conv1x1_bn_relu_kernel(w_ref, x_ref, bias_ref, o_ref):
    # w_ref:    (Cout, Cin)     BN-scale-folded weight, resident across the grid
    # x_ref:    (nb, Cin, thw)  spatial tile of nb images (channels-first)
    # bias_ref: (Cout, 1)       folded BN bias = beta - mean * gamma * inv_std
    # o_ref:    (nb, Cout, thw)
    w = w_ref[...]
    b = bias_ref[...]
    nb = x_ref.shape[0]
    for i in range(nb):  # small static unroll; each iteration is one MXU matmul
        acc = jnp.dot(w, x_ref[i], preferred_element_type=jnp.float32)
        o_ref[i] = jnp.maximum(acc + b, 0.0).astype(o_ref.dtype)


def _tpu_vmem_capacity_bytes():
    try:
        return int(pltpu.get_tpu_info().vmem_capacity_bytes)
    except Exception:
        return 64 * _MIB  # conservative (v7x-sized) fallback


def _budgets():
    """Generation-aware (pipelined-tile budget, vmem_limit cap, min grid steps)."""
    vmem = _tpu_vmem_capacity_bytes()
    if vmem <= 64 * _MIB:
        # v7x-class: 64 MiB physical VMEM, 2 TensorCores per chip.
        return 24 * _MIB, 44 * _MIB, 4
    # v5e / v6e: 128 MiB physical VMEM, 1 TensorCore.
    return 72 * _MIB, 104 * _MIB, 1


def _pick_tiles(n, cin, cout, hw, itemsize, tile_budget, min_steps):
    """Pick (images per block, spatial tile) so double-buffered tiles fit budget."""
    per_col = 2 * (cin + cout) * itemsize  # double-buffered x + out, per column

    if hw <= 128:
        thw = hw  # block equals full (small) spatial dim -> legal single tile
    else:
        max_cols = max(tile_budget // per_col, 128)
        thw = min(hw, (max_cols // 128) * 128)
        if thw >= hw:
            thw = hw  # whole spatial extent fits in one block

    # Small-HW layers: amortize per-step overhead over several images per block.
    nb = 1
    if thw == hw:
        per_image = max(per_col * hw, 1)
        nb = max(1, min(n, _MAX_IMAGES_PER_BLOCK, tile_budget // per_image))

    # Keep enough grid steps that a 2-TC chip (v7x) can split the work.
    if min_steps > 1:
        while nb > 1 and pl.cdiv(n, nb) * pl.cdiv(hw, thw) < min_steps:
            nb = max(1, nb // 2)
        if (pl.cdiv(n, nb) * pl.cdiv(hw, thw) < min_steps
                and thw == hw and hw >= 2 * 128):
            want = pl.cdiv(min_steps, max(pl.cdiv(n, nb), 1))
            thw = max(128, ((hw // want) // 128) * 128)

    return nb, thw


@functools.partial(jax.jit, static_argnames=("stride", "eps", "groups"))
def conv1x1_bn_relu(x_nchw, weight, gamma, beta, running_mean, running_var,
                    *, stride=1, eps=1e-5, groups=1):
    """1x1 conv (bias=False) + BatchNorm2d (eval mode) + ReLU.

    x_nchw: (N, Cin, H, W) float32
    weight: (Cout, Cin, 1, 1) float32   (PyTorch Conv2d weight layout)
    """
    if groups != 1:
        # TODO(synk): grouped 1x1 conv (groups > 1) not implemented; the OSNet
        # Conv1x1 module uses the default groups=1.
        raise NotImplementedError("groups > 1 not supported")

    n, cin, h, w = x_nchw.shape
    cout = weight.shape[0]

    # Stride for a 1x1 conv with padding 0 == pure spatial subsampling.
    if stride != 1:
        # TODO(synk): fold the stride subsample into the kernel (strided pl.ds
        # on an (H, W)-blocked input) instead of this extra XLA HBM pass.
        x_nchw = x_nchw[:, :, ::stride, ::stride]
        n, cin, h, w = x_nchw.shape

    hw = h * w
    # Pure reshape (contiguous); no NCHW<->NHWC transpose passes.
    x_chw = x_nchw.reshape(n, cin, hw)

    # Fold eval-mode BatchNorm: scale into the weight, bias kept per-channel.
    inv_std = 1.0 / jnp.sqrt(running_var.astype(jnp.float32) + eps)
    scale = gamma.astype(jnp.float32) * inv_std                       # (Cout,)
    w_mat = weight[:, :, 0, 0].astype(jnp.float32) * scale[:, None]   # (Cout, Cin)
    bias = (beta.astype(jnp.float32)
            - running_mean.astype(jnp.float32) * scale).reshape(cout, 1)

    itemsize = jnp.dtype(x_chw.dtype).itemsize
    tile_budget, vmem_cap, min_steps = _budgets()
    nb, thw = _pick_tiles(n, cin, cout, hw, itemsize, tile_budget, min_steps)

    grid = (pl.cdiv(n, nb), pl.cdiv(hw, thw))

    est_bytes = (2 * nb * (cin + cout) * thw) * itemsize \
        + 2 * (cin * cout + cout) * 4
    vmem_limit = int(min(vmem_cap, max(32 * _MIB, est_bytes + 8 * _MIB)))

    # No padding and no trailing slice: partial boundary blocks (spatial or
    # batch) are bounds-handled by Pallas; out-of-bounds results are dropped.
    out_chw = pl.pallas_call(
        _conv1x1_bn_relu_kernel,
        out_shape=jax.ShapeDtypeStruct((n, cout, hw), x_chw.dtype),
        grid_spec=pltpu.PrefetchScalarGridSpec(
            num_scalar_prefetch=0,
            grid=grid,
            in_specs=[
                pl.BlockSpec((cout, cin), lambda b, j: (0, 0)),        # weight
                pl.BlockSpec((nb, cin, thw), lambda b, j: (b, 0, j)),  # x tile
                pl.BlockSpec((cout, 1), lambda b, j: (0, 0)),          # bias
            ],
            out_specs=pl.BlockSpec((nb, cout, thw), lambda b, j: (b, 0, j)),
        ),
        compiler_params=pltpu.CompilerParams(
            dimension_semantics=("parallel", "parallel"),
            vmem_limit_bytes=vmem_limit,
        ),
    )(w_mat, x_chw, bias)

    # (N, Cout, H*W) -> (N, Cout, H, W): pure reshape, no transpose.
    return out_chw.reshape(n, cout, h, w)


if __name__ == "__main__":
    key = jax.random.PRNGKey(0)
    k_x, k_w, k_m, k_v = jax.random.split(key, 4)

    N, CIN, H, W = 2, 4, 16, 16
    COUT = 8

    x = jax.random.normal(k_x, (N, CIN, H, W), dtype=jnp.float32)
    weight = jax.random.normal(k_w, (COUT, CIN, 1, 1), dtype=jnp.float32) * 0.1
    gamma = jnp.ones((COUT,), jnp.float32)
    beta = jnp.zeros((COUT,), jnp.float32)
    running_mean = jax.random.normal(k_m, (COUT,), dtype=jnp.float32) * 0.05
    running_var = jnp.abs(jax.random.normal(k_v, (COUT,), dtype=jnp.float32)) + 1.0

    out = conv1x1_bn_relu(x, weight, gamma, beta, running_mean, running_var)
    jax.block_until_ready(out)

    # Pure-JAX reference check (same math, XLA path).
    w_ref = weight[:, :, 0, 0]                      # (Cout, Cin)
    ref = jnp.einsum("nchw,dc->ndhw", x, w_ref)
    scale_ref = gamma / jnp.sqrt(running_var + 1e-5)
    bias_ref = beta - running_mean * scale_ref
    ref = jnp.maximum(ref * scale_ref[None, :, None, None]
                      + bias_ref[None, :, None, None], 0.0)

    assert out.shape == (N, COUT, H, W)
    assert jnp.allclose(out, ref, atol=1e-5, rtol=1e-5)

    print("KERNEL_OK")
</pallas_src>

<mosaic_0001>
module attributes {stable_mosaic.version = 11 : i64} {
  func.func @_conv1x1_bn_relu_kernel(%arg0: i32, %arg1: i32, %arg2: memref<8x4xf32, #tpu.memory_space<vmem>>, %arg3: memref<1x4x128xf32, #tpu.memory_space<vmem>>, %arg4: memref<8x1xf32, #tpu.memory_space<vmem>>, %arg5: memref<1x8x128xf32, #tpu.memory_space<vmem>>) attributes {dimension_semantics = [#tpu.dimension_semantics<parallel>, #tpu.dimension_semantics<parallel>], iteration_bounds = array<i64: 2, 2>, scalar_prefetch = 0 : i64, scratch_operands = 0 : i64, tpu.core_type = #tpu.core_type<tc>, window_params = [{pipeline_mode = #tpu.pipeline_mode<synchronous>, transform_indices = @transform_0, window_bounds = array<i64: 8, 4>}, {transform_indices = @transform_1, window_bounds = array<i64: 1, 4, 128>}, {pipeline_mode = #tpu.pipeline_mode<synchronous>, transform_indices = @transform_2, window_bounds = array<i64: 8, 1>}, {transform_indices = @transform_3, window_bounds = array<i64: 1, 8, 128>}]} {
    %c0 = arith.constant 0 : index
    %c0_0 = arith.constant 0 : index
    %0 = vector.load %arg2[%c0, %c0_0] : memref<8x4xf32, #tpu.memory_space<vmem>>, vector<8x4xf32>
    %c0_1 = arith.constant 0 : index
    %c0_2 = arith.constant 0 : index
    %1 = vector.load %arg4[%c0_1, %c0_2] : memref<8x1xf32, #tpu.memory_space<vmem>>, vector<8x1xf32>
    %c0_3 = arith.constant 0 : index
    %c0_4 = arith.constant 0 : index
    %c0_5 = arith.constant 0 : index
    %2 = vector.load %arg3[%c0_3, %c0_4, %c0_5] : memref<1x4x128xf32, #tpu.memory_space<vmem>>, vector<1x4x128xf32>
    %3 = vector.shape_cast %2 : vector<1x4x128xf32> to vector<4x128xf32>
    %cst = arith.constant dense<0.000000e+00> : vector<8x128xf32>
    %4 = tpu.matmul %0, %3, %cst {dimension_numbers = #tpu.dot_dimension_numbers<[1], [0], [0], [1], [0, 0, 1, 1], [], []>} : vector<8x4xf32>, vector<4x128xf32>, vector<8x128xf32> -> vector<8x128xf32>
    %5 = vector.broadcast %1 : vector<8x1xf32> to vector<8x128xf32>
    %6 = arith.addf %4, %5 : vector<8x128xf32>
    %cst_6 = arith.constant 0.000000e+00 : f32
    %7 = vector.broadcast %cst_6 : f32 to vector<8x128xf32>
    %8 = arith.maximumf %6, %7 : vector<8x128xf32>
    %c0_7 = arith.constant 0 : index
    %c0_8 = arith.constant 0 : index
    %c0_9 = arith.constant 0 : index
    %9 = vector.load %arg5[%c0_7, %c0_8, %c0_9] : memref<1x8x128xf32, #tpu.memory_space<vmem>>, vector<1x8x128xf32>
    %10 = vector.shape_cast %9 : vector<1x8x128xf32> to vector<8x128xf32>
    %11 = vector.shape_cast %8 : vector<8x128xf32> to vector<1x8x128xf32>
    tpu.vector_store %arg5[%c0_7, %c0_8, %c0_9], %11 {strides = array<i32>} : memref<1x8x128xf32, #tpu.memory_space<vmem>>, vector<1x8x128xf32>,
    return
  }
  func.func @transform_0(%arg0: i32, %arg1: i32) -> (i32, i32) {
    %c0_i32 = arith.constant 0 : i32
    %c0_i32_0 = arith.constant 0 : i32
    %c0_i32_1 = arith.constant 0 : i32
    return %c0_i32, %c0_i32_0 : i32, i32
  }
  func.func @transform_1(%arg0: i32, %arg1: i32) -> (i32, i32, i32) {
    %c0_i32 = arith.constant 0 : i32
    %c0_i32_0 = arith.constant 0 : i32
    return %arg0, %c0_i32, %arg1 : i32, i32, i32
  }
  func.func @transform_2(%arg0: i32, %arg1: i32) -> (i32, i32) {
    %c0_i32 = arith.constant 0 : i32
    %c0_i32_0 = arith.constant 0 : i32
    %c0_i32_1 = arith.constant 0 : i32
    return %c0_i32, %c0_i32_0 : i32, i32
  }
  func.func @transform_3(%arg0: i32, %arg1: i32) -> (i32, i32, i32) {
    %c0_i32 = arith.constant 0 : i32
    %c0_i32_0 = arith.constant 0 : i32
    return %arg0, %c0_i32, %arg1 : i32, i32, i32
  }
}

</mosaic_0001>

<llo_original>
// kernel: conv1x1_bn_relu.1
$region0: #{conv1x1_bn_relu.1}
  #allocation0 [shape = 'u32[]', space=smem, size = 0x4, offset = 0x4, fixed_abs, tag = 'smem constant byte address 0x4 - core index']
  #allocation1 [shape = 'u32[144,128]{1,0:T(1,128)}', space=vmem, size = 0x12000, scoped, tag = 'internal scratch']
  %s0 = inlined_call_operand.vmem [shape: f32[8,4], index: 0, kind: input, shape index: {}]
  %s1 = inlined_call_operand.vmem [shape: f32[2,4,256], index: 1, kind: input, shape index: {}]
  %s2 = inlined_call_operand.vmem [shape: f32[8,1], index: 2, kind: input, shape index: {}]
  %s3 = inlined_call_operand.vmem [shape: f32[2,8,256], index: 3, kind: output, shape index: {}]
  %s4 = sld [smem:[#allocation0]]
  $region45: #{conv1x1_bn_relu.1} parent=0
    _
  %s6 = ssub.s32 1, %s4
  %s7 = scalar_select 0, %s6, %s4
  loop: start=0, step=1, limit=6
  $region2: #{conv1x1_bn_relu.1} parent=0 // loop_pre_header
    _
  $region3: #{conv1x1_bn_relu.1} parent=0 // loop_header
    %s9 = sphi 0, %s13
    %p10 = scmp.ge.s32.totalorder %s9, 6
    %s16 = sphi 0, %s28
    %s17 = sphi 0, %s24
    %s18 = sphi 0, %s16
    %s19 = sphi 0, %s17
    %s20 = sphi 0, %s18
    %s21 = sphi 0, %s19
    %s29 = sphi 0, %s29
    %s31 = sphi 0, %s29
    %s32 = sphi 0, %s31
    %s46 = sphi 0, %s32
    %s54 = sphi 0, %s56
    %s57 = sphi 0, %s54
    %s58 = sphi 0, %s57
    %s74 = sphi 0, %s58
    %s78 = sphi 0, %s78
    %s80 = sphi 0, %s78
    %s81 = sphi 0, %s80
    %s95 = sphi 0, %s81
    %s103 = sphi 0, %s105
    %s106 = sphi 0, %s103
    %s107 = sphi 0, %s106
    %s123 = sphi 0, %s107
  $region4: #{conv1x1_bn_relu.1} parent=0 // loop_header_branch
    %12 = sbr.rel (%p10) target = $region8
  $region5: #{conv1x1_bn_relu.1} parent=0 // loop_body
    %s14 = ssub.s32 %s9, 1
    %s15 = ssub.s32 %s9, 2
    %s22 = sadd.s32 1, %s17
    %p23 = scmp.ge.s32.totalorder %s22, 2
    %s24 = scalar_select %p23, 0, %s22
    %s25 = sadd.s32 1, %s16
    %s26 = scalar_select %p23, %s25, %s16
    %p27 = scmp.ge.s32.totalorder %s26, 2
    %s28 = scalar_select %p27, 0, %s26
    %s30 = sadd.s32 %s29, 1
    %p33 = scmp.eq.s32.totalorder %s9, 3
    %p34 = scmp.ne.s32.totalorder %s29, %s31
    %p35 = scmp.eq.s32.totalorder %s9, 0
    %p36 = por %p34, %p35
    %p37 = scmp.ne.s32.totalorder %s29, %s31
    %p38 = scmp.eq.s32.totalorder %s14, 3
    %p39 = por %p37, %p38
    %p40 = scmp.ne.s32.totalorder %s31, %s32
    %p41 = scmp.eq.s32.totalorder %s14, 0
    %p42 = por %p40, %p41
    %p43 = scmp.ne.s32.totalorder %s31, %s32
    %p44 = scmp.eq.s32.totalorder %s15, 3
    %p45 = por %p43, %p44
    %p47 = scmp.ne.s32.totalorder %s32, %s46
    %p48 = scmp.eq.s32.totalorder %s15, 0
    %p49 = por %p47, %p48
    %s50 = ssub.s32 %s16, %s28
    %s51 = ssub.s32 %s17, %s24
    %s52 = sor.u32 %s50, %s51
    %p53 = scmp.eq.s32.totalorder %s52, 0
    %s55 = sadd.s32 %s54, 1
    %s56 = scalar_select %p53, %s54, %s55
    %p59 = pneg %p53
    %p60 = scmp.eq.s32.totalorder %s9, 3
    %p61 = por %p59, %p60
    %p62 = scmp.ne.s32.totalorder %s54, %s57
    %p63 = scmp.eq.s32.totalorder %s9, 0
    %p64 = por %p62, %p63
    %p65 = scmp.ne.s32.totalorder %s54, %s57
    %p66 = scmp.eq.s32.totalorder %s14, 3
    %p67 = por %p65, %p66
    %p68 = scmp.ne.s32.totalorder %s57, %s58
    %p69 = scmp.eq.s32.totalorder %s14, 0
    %p70 = por %p68, %p69
    %p71 = scmp.ne.s32.totalorder %s57, %s58
    %p72 = scmp.eq.s32.totalorder %s15, 3
    %p73 = por %p71, %p72
    %p75 = scmp.ne.s32.totalorder %s58, %s74
    %p76 = scmp.eq.s32.totalorder %s15, 0
    %p77 = por %p75, %p76
    %s79 = sadd.s32 %s78, 1
    %p82 = scmp.eq.s32.totalorder %s9, 3
    %p83 = scmp.ne.s32.totalorder %s78, %s80
    %p84 = scmp.eq.s32.totalorder %s9, 0
    %p85 = por %p83, %p84
    %p86 = scmp.ne.s32.totalorder %s78, %s80
    %p87 = scmp.eq.s32.totalorder %s14, 3
    %p88 = por %p86, %p87
    %p89 = scmp.ne.s32.totalorder %s80, %s81
    %p90 = scmp.eq.s32.totalorder %s14, 0
    %p91 = por %p89, %p90
    %p92 = scmp.ne.s32.totalorder %s80, %s81
    %p93 = scmp.eq.s32.totalorder %s15, 3
    %p94 = por %p92, %p93
    %p96 = scmp.ne.s32.totalorder %s81, %s95
    %p97 = scmp.eq.s32.totalorder %s15, 0
    %p98 = por %p96, %p97
    %s99 = ssub.s32 %s16, %s28
    %s100 = ssub.s32 %s17, %s24
    %s101 = sor.u32 %s99, %s100
    %p102 = scmp.eq.s32.totalorder %s101, 0
    %s104 = sadd.s32 %s103, 1
    %s105 = scalar_select %p102, %s103, %s104
    %p108 = pneg %p102
    %p109 = scmp.eq.s32.totalorder %s9, 3
    %p110 = por %p108, %p109
    %p111 = scmp.ne.s32.totalorder %s103, %s106
    %p112 = scmp.eq.s32.totalorder %s9, 0
    %p113 = por %p111, %p112
    %p114 = scmp.ne.s32.totalorder %s103, %s106
    %p115 = scmp.eq.s32.totalorder %s14, 3
    %p116 = por %p114, %p115
    %p117 = scmp.ne.s32.totalorder %s106, %s107
    %p118 = scmp.eq.s32.totalorder %s14, 0
    %p119 = por %p117, %p118
    %p120 = scmp.ne.s32.totalorder %s106, %s107
    %p121 = scmp.eq.s32.totalorder %s15, 3
    %p122 = por %p120, %p121
    %p124 = scmp.ne.s32.totalorder %s107, %s123
    %p125 = scmp.eq.s32.totalorder %s15, 0
    %p126 = por %p124, %p125
    %p127 = scmp.le.s32.totalorder 1, %s9
    %p128 = scmp.lt.s32.totalorder %s9, 5
    %p129 = pnand %p127, %p128
    %p130 = pneg %p129
    // Predicated region
    $region9: #{conv1x1_bn_relu.1} parent=5 // pred_check
      _
    $region10: #{conv1x1_bn_relu.1} parent=5 // pred_check_branch
      %132 = sbr.rel (%p129) target = $region12
    $region11: #{conv1x1_bn_relu.1} parent=5 // pred_region
      %s133 = ssub.s32 %s9, 1
      // Predicated region
      $region13: #{conv1x1_bn_relu.1} parent=11 // pred_check
        %p134 = pneg %p42
      $region14: #{conv1x1_bn_relu.1} parent=11 // pred_check_branch
        %136 = sbr.rel (%p134) target = $region16
      $region15: #{conv1x1_bn_relu.1} parent=11 // pred_region
        _
      $region16: #{conv1x1_bn_relu.1} parent=11 // pred_fallthru
        _
      // Predicated region
      $region17: #{conv1x1_bn_relu.1} parent=11 // pred_check
        %p137 = pneg %p91
      $region18: #{conv1x1_bn_relu.1} parent=11 // pred_check_branch
        %139 = sbr.rel (%p137) target = $region20
      $region19: #{conv1x1_bn_relu.1} parent=11 // pred_region
        _
      $region20: #{conv1x1_bn_relu.1} parent=11 // pred_fallthru
        _
    $region12: #{conv1x1_bn_relu.1} parent=5 // pred_fallthru
      _
    %p140 = scmp.lt.s32.totalorder %s9, 4
    // Predicated region
    $region21: #{conv1x1_bn_relu.1} parent=5 // pred_check
      %p141 = pneg %p140
    $region22: #{conv1x1_bn_relu.1} parent=5 // pred_check_branch
      %143 = sbr.rel (%p141) target = $region24
    $region23: #{conv1x1_bn_relu.1} parent=5 // pred_region
      // Predicated region
      $region25: #{conv1x1_bn_relu.1} parent=23 // pred_check
        %p144 = pneg %p64
      $region26: #{conv1x1_bn_relu.1} parent=23 // pred_check_branch
        %146 = sbr.rel (%p144) target = $region28
      $region27: #{conv1x1_bn_relu.1} parent=23 // pred_region
        %p147 = scmp.lt.s32.totalorder %s16, 1
        %s148 = scalar_select %p147, %s16, 1
        %p149 = scmp.lt.s32.totalorder %s17, 1
        %s150 = scalar_select %p149, %s17, 1
        %s151 = smul.addr %s148, 2
        %s152 = sadd.s32 %s150, %s151
        %s153 = smul.addr %s152, 4
        %s154 = scalar_lea.vmem %s1, %s153
      $region28: #{conv1x1_bn_relu.1} parent=23 // pred_fallthru
        _
    $region24: #{conv1x1_bn_relu.1} parent=5 // pred_fallthru
      _
    %p155 = scmp.le.s32.totalorder 1, %s9
    %p156 = scmp.lt.s32.totalorder %s9, 5
    %p157 = pnand %p155, %p156
    %p158 = pneg %p157
    // Predicated region
    $region29: #{conv1x1_bn_relu.1} parent=5 // pred_check
      _
    $region30: #{conv1x1_bn_relu.1} parent=5 // pred_check_branch
      %160 = sbr.rel (%p157) target = $region32
    $region31: #{conv1x1_bn_relu.1} parent=5 // pred_region
      %s161 = ssub.s32 %s9, 1
      %p162 = pneg %p42
      %p163 = pneg %p39
      %p164 = scmp.lt.s32.totalorder %s18, 1
      %s165 = scalar_select %p164, %s18, 1
      %p166 = scmp.lt.s32.totalorder %s19, 1
      %s167 = scalar_select %p166, %s19, 1
      %s168 = smul.addr %s165, 2
      %s169 = sadd.s32 %s167, %s168
      %s170 = smul.addr %s169, 4
      %s171 = scalar_lea.vmem %s1, %s170
      %p172 = pneg %p70
      %p173 = pneg %p67
      %p174 = pneg %p91
      %p175 = pneg %p88
      %p176 = pneg %p119
      %p177 = pneg %p116
      %p178 = scmp.lt.s32.totalorder %s18, 1
      %s179 = scalar_select %p178, %s18, 1
      %p180 = scmp.lt.s32.totalorder %s19, 1
      %s181 = scalar_select %p180, %s19, 1
      %s182 = smul.addr %s179, 2
      %s183 = sadd.s32 %s181, %s182
      %s184 = smul.addr %s183, 8
      %s185 = scalar_lea.vmem %s3, %s184
      %p186 = scmp.lt.s32.totalorder %s18, 1
      %s187 = scalar_select %p186, %s18, 1
      %p188 = scmp.lt.s32.totalorder %s19, 1
      %s189 = scalar_select %p188, %s19, 1
      %s190 = smul.addr %s187, 2
      %s191 = sadd.s32 %s189, %s190
      %s192 = smul.addr %s191, 4
      %s193 = scalar_lea.vmem %s1, %s192
      %p194 = scmp.lt.s32.totalorder %s18, 1
      %s195 = scalar_select %p194, %s18, 1
      %p196 = scmp.lt.s32.totalorder %s19, 1
      %s197 = scalar_select %p196, %s19, 1
      %s198 = smul.addr %s195, 2
      %s199 = sadd.s32 %s197, %s198
      %s200 = smul.addr %s199, 8
      %s201 = scalar_lea.vmem %s3, %s200
      %v202 = vld [vmem:[%s0] sm:$0xff]
      %v203 = vld [vmem:[%s2] sm:$0xff]
      %v204 = vld [vmem:[%s193] sm:$0xf]
      %206 = vset.pattern.permute.xlu0 0
      %207 = vperm.xlu0 %206, %v203
      %v208 = vpop.permute.xlu0 %207
      %vm210 = vcmask 31744
      %v212 = vsel %vm210, %v202, 0
      %vm214 = vcmask 1043456
      %v216 = vsel %vm214, %v204, 0
      %218 = vmatprep.subr.mxu0 0.0
      %219 = vmatpush1.msra.mxu0 %v216
      %220 = vmatprep.subr.mxu0 0.0
      %221 = vmatpush1.msra.mxu0 0.0
      %222 = vmatprep.subr.mxu0 0.0
      %223 = vmatpush1.msra.mxu0 0.0
      %224 = vmatprep.subr.mxu0 0.0
      %225 = vmatpush1.msra.mxu0 0.0
      %226 = vmatprep.subr.mxu0 0.0
      %227 = vmatpush1.msra.mxu0 0.0
      %228 = vmatprep.subr.mxu0 0.0
      %229 = vmatpush1.msra.mxu0 0.0
      %230 = vmatprep.subr.mxu0 0.0
      %231 = vmatpush1.msra.mxu0 0.0
      %232 = vmatprep.subr.mxu0 0.0
      %233 = vmatpush1.msra.mxu0 0.0
      %234 = vmatprep.subr.mxu0 0.0
      %235 = vmatpush1.msra.mxu0 0.0
      %236 = vmatprep.subr.mxu0 0.0
      %237 = vmatpush1.msra.mxu0 0.0
      %238 = vmatprep.subr.mxu0 0.0
      %239 = vmatpush1.msra.mxu0 0.0
      %240 = vmatprep.subr.mxu0 0.0
      %241 = vmatpush1.msra.mxu0 0.0
      %242 = vmatprep.subr.mxu0 0.0
      %243 = vmatpush1.msra.mxu0 0.0
      %244 = vmatprep.subr.mxu0 0.0
      %245 = vmatpush1.msra.mxu0 0.0
      %246 = vmatprep.subr.mxu0 0.0
      %247 = vmatpush1.msra.mxu0 0.0
      %248 = vmatprep.subr.mxu0 0.0
      %249 = vmatpush1.msra.mxu0 0.0
      %250 = vmatprep.subr.mxu0 0.0
      %251 = vmatpush1.msra.mxu0 0.0
      %252 = vmatprep.subr.mxu0 0.0
      %253 = vmatpush1.msra.mxu0 0.0
      %254 = vmatprep.subr.mxu0 0.0
      %255 = vmatpush1.msra.mxu0 0.0
      %256 = vmatprep.subr.mxu0 0.0
      %257 = vmatpush1.msra.mxu0 0.0
      %258 = vmatprep.subr.mxu0 0.0
      %259 = vmatpush1.msra.mxu0 0.0
      %260 = vmatprep.subr.mxu0 0.0
      %261 = vmatpush1.msra.mxu0 0.0
      %262 = vmatprep.subr.mxu0 0.0
      %263 = vmatpush1.msra.mxu0 0.0
      %264 = vmatprep.subr.mxu0 0.0
      %265 = vmatpush1.msra.mxu0 0.0
      %266 = vmatprep.subr.mxu0 0.0
      %267 = vmatpush1.msra.mxu0 0.0
      %268 = vmatprep.subr.mxu0 0.0
      %269 = vmatpush1.msra.mxu0 0.0
      %270 = vmatprep.subr.mxu0 0.0
      %271 = vmatpush1.msra.mxu0 0.0
      %272 = vmatprep.subr.mxu0 0.0
      %273 = vmatpush1.msra.mxu0 0.0
      %274 = vmatprep.subr.mxu0 0.0
      %275 = vmatpush1.msra.mxu0 0.0
      %276 = vmatprep.subr.mxu0 0.0
      %277 = vmatpush1.msra.mxu0 0.0
      %278 = vmatprep.subr.mxu0 0.0
      %279 = vmatpush1.msra.mxu0 0.0
      %280 = vmatprep.subr.mxu0 0.0
      %281 = vmatpush1.msra.mxu0 0.0
      %282 = vmatprep.mubr.f32.mxu0 0.0
      %283 = vmatmul.mubr.f32.gmra.mrb[0].mxu0 %v212
      %v284 = vpop.f32.mrb[0].mxu0
      %v285 = vadd.f32 %v208, %v284
      %v286 = vpop.f32.mrb[0].mxu0
      %287 = vdwg.mxu0
      %v288 = vmax.f32 %v285, 0.0
      %289 = vst [vmem:[%s201] sm:$0xff] %v288
      %p290 = scmp.lt.s32.totalorder %s18, 1
      %s291 = scalar_select %p290, %s18, 1
      %p292 = scmp.lt.s32.totalorder %s19, 1
      %s293 = scalar_select %p292, %s19, 1
      %s294 = smul.addr %s291, 2
      %s295 = sadd.s32 %s293, %s294
      %s296 = smul.addr %s295, 8
      %s297 = scalar_lea.vmem %s3, %s296
      // Predicated region
      $region33: #{conv1x1_bn_relu.1} parent=31 // pred_check
        %p298 = pneg %p116
      $region34: #{conv1x1_bn_relu.1} parent=31 // pred_check_branch
        %300 = sbr.rel (%p298) target = $region36
      $region35: #{conv1x1_bn_relu.1} parent=31 // pred_region
        _
      $region36: #{conv1x1_bn_relu.1} parent=31 // pred_fallthru
        _
    $region32: #{conv1x1_bn_relu.1} parent=5 // pred_fallthru
      _
    %p301 = scmp.le.s32.totalorder 2, %s9
    // Predicated region
    $region37: #{conv1x1_bn_relu.1} parent=5 // pred_check
      %p302 = pneg %p301
    $region38: #{conv1x1_bn_relu.1} parent=5 // pred_check_branch
      %304 = sbr.rel (%p302) target = $region40
    $region39: #{conv1x1_bn_relu.1} parent=5 // pred_region
      %s305 = ssub.s32 %s9, 2
      // Predicated region
      $region41: #{conv1x1_bn_relu.1} parent=39 // pred_check
        %p306 = pneg %p122
      $region42: #{conv1x1_bn_relu.1} parent=39 // pred_check_branch
        %308 = sbr.rel (%p306) target = $region44
      $region43: #{conv1x1_bn_relu.1} parent=39 // pred_region
        %p309 = scmp.lt.s32.totalorder %s20, 1
        %s310 = scalar_select %p309, %s20, 1
        %p311 = scmp.lt.s32.totalorder %s21, 1
        %s312 = scalar_select %p311, %s21, 1
        %s313 = smul.addr %s310, 2
        %s314 = sadd.s32 %s312, %s313
        %s315 = smul.addr %s314, 8
        %s316 = scalar_lea.vmem %s3, %s315
      $region44: #{conv1x1_bn_relu.1} parent=39 // pred_fallthru
        _
    $region40: #{conv1x1_bn_relu.1} parent=5 // pred_fallthru
      _
  $region6: #{conv1x1_bn_relu.1} parent=0 // loop_footer
    %s13 = sadd.s32 1, %s9
  $region7: #{conv1x1_bn_relu.1} parent=0 // loop_footer_branch
    %8 = sbr.rel target = $region3
  $region8: #{conv1x1_bn_relu.1} parent=0 // loop_exit
    _

</llo_original>
